<compile_context>
chip_gen: v5e
topology: v5e:2x2
jax: 0.10.0
libtpu: 0.0.40
codegen_flags: <defaults>
</compile_context>

<pallas_src>
import jax
import jax.numpy as jnp
from jax.experimental import pallas as pl
from jax.experimental.pallas import tpu as pltpu


# --------------------------------------------------------------------------- #
# kernel: per-image (Cout, Cin) @ (Cin, T) with fused bias add
# --------------------------------------------------------------------------- #
def _outconv_kernel(x_ref, w_ref, b_ref, out_ref):
    # x_ref:   (1, Cin, T)   VMEM, channel-major / spatial-last (lane-dense)
    # w_ref:   (Cout, Cin)   VMEM
    # b_ref:   (Cout, 1)     VMEM, f32
    # out_ref: (1, Cout, T)  VMEM, same dtype as x
    cin = x_ref.shape[1]
    cout = out_ref.shape[1]

    x = x_ref[0]
    w = w_ref[...]
    b = b_ref[...]

    if cout <= 8 and cin <= 8:
        # VPU path: MXU would be <0.1% occupied and we'd still pay push/pop
        # latency.  Unrolled broadcast-FMA stays lane-dense on T.
        xf = x.astype(jnp.float32)
        wf = w.astype(jnp.float32)
        acc = wf[:, 0:1] * xf[0:1, :]
        for i in range(1, cin):
            acc = acc + wf[:, i:i + 1] * xf[i:i + 1, :]
        y = acc + b
    else:
        # MXU path with f32 accumulation (operands may be bf16).
        y = jnp.dot(w, x, preferred_element_type=jnp.float32) + b

    out_ref[0] = y.astype(out_ref.dtype)


# --------------------------------------------------------------------------- #
# tile selection: lane-multiple spatial tile sized by a VMEM budget
# --------------------------------------------------------------------------- #
def _round_up8(c):
    return -(-c // 8) * 8


def _pick_spatial_tile(hw, cin, cout, itemsize,
                       vmem_budget=12 << 20, max_tile=8192):
    """Spatial tile: multiple of 128 (or full extent when hw <= 128), sized so
    the double-buffered x + out blocks (with (8,*) sublane padding) stay under
    a conservative VMEM budget that fits every generation's scoped default."""
    if hw <= 128:
        return hw
    per_lane = 2 * (_round_up8(cin) + _round_up8(cout)) * itemsize  # 2 buffers
    budget_lanes = max(128, ((vmem_budget // per_lane) // 128) * 128)
    tile = min(max_tile, budget_lanes, (hw // 128) * 128)
    return max(128, tile)


# --------------------------------------------------------------------------- #
# wrapper
# --------------------------------------------------------------------------- #
@jax.jit
def outconv_forward(x_nchw, weight, bias):
    """x_nchw: (N, Cin, H, W); weight: (Cout, Cin, 1, 1); bias: (Cout,)."""
    N, Cin, H, W = x_nchw.shape
    Cout = weight.shape[0]
    HW = H * W
    dtype = x_nchw.dtype
    itemsize = jnp.dtype(dtype).itemsize

    x = x_nchw.reshape(N, Cin, HW)                 # free reshape, native dtype
    w = weight.reshape(Cout, Cin).astype(dtype)    # tiny
    b = bias.astype(jnp.float32).reshape(Cout, 1)  # keep bias add in f32

    tile = _pick_spatial_tile(HW, Cin, Cout, itemsize)
    num_spatial = -(-HW // tile)
    # Guarantee >=2 parallel grid blocks so v7x's two TensorCores both work.
    if N * num_spatial < 2 and HW > 128:
        tile = max(128, ((tile // 2) // 128) * 128)
        num_spatial = -(-HW // tile)
    grid = (N, num_spatial)

    cost = pl.CostEstimate(
        flops=2 * N * Cout * Cin * HW,
        transcendentals=0,
        bytes_accessed=itemsize * N * HW * (Cin + Cout) + 4 * Cout * (Cin + 1),
    )

    out = pl.pallas_call(
        _outconv_kernel,
        out_shape=jax.ShapeDtypeStruct((N, Cout, HW), dtype),
        grid=grid,
        in_specs=[
            pl.BlockSpec((1, Cin, tile), lambda n, s: (n, 0, s)),
            pl.BlockSpec((Cout, Cin), lambda n, s: (0, 0)),
            pl.BlockSpec((Cout, 1), lambda n, s: (0, 0)),
        ],
        out_specs=pl.BlockSpec((1, Cout, tile), lambda n, s: (n, 0, s)),
        compiler_params=pltpu.CompilerParams(
            dimension_semantics=("parallel", "parallel")),
        cost_estimate=cost,
    )(x, w, b)

    return out.reshape(N, Cout, H, W)


# --------------------------------------------------------------------------- #
# main: deterministic inputs, run once, verify against a plain-JAX reference
# --------------------------------------------------------------------------- #
if __name__ == "__main__":
    N, Cin, H, W = 2, 4, 16, 16
    Cout = 2

    key = jax.random.PRNGKey(0)
    kx, kw, kb = jax.random.split(key, 3)
    x = jax.random.normal(kx, (N, Cin, H, W), jnp.float32)
    weight = jax.random.normal(kw, (Cout, Cin, 1, 1), jnp.float32) * (1.0 / Cin ** 0.5)
    bias = 0.1 * jax.random.normal(kb, (Cout,), jnp.float32)

    out = jax.block_until_ready(outconv_forward(x, weight, bias))
    assert out.shape == (N, Cout, H, W), out.shape
    assert out.dtype == x.dtype, out.dtype

    # reference: 1x1 conv == channel matmul + bias
    ref = (jnp.einsum("oi,nihw->nohw", weight.reshape(Cout, Cin), x)
           + bias.reshape(1, Cout, 1, 1))
    assert bool(jnp.all(jnp.isfinite(out)))
    assert jnp.allclose(out, ref, rtol=1e-5, atol=1e-5), float(
        jnp.max(jnp.abs(out - ref)))

    print("KERNEL_OK")
</pallas_src>

<mosaic_0001>
module attributes {stable_mosaic.version = 11 : i64} {
  func.func @_outconv_kernel(%arg0: i32, %arg1: i32, %arg2: memref<1x4x256xf32, #tpu.memory_space<vmem>>, %arg3: memref<2x4xf32, #tpu.memory_space<vmem>>, %arg4: memref<2x1xf32, #tpu.memory_space<vmem>>, %arg5: memref<1x2x256xf32, #tpu.memory_space<vmem>>) attributes {dimension_semantics = [#tpu.dimension_semantics<parallel>, #tpu.dimension_semantics<parallel>], iteration_bounds = array<i64: 2, 1>, scalar_prefetch = 0 : i64, scratch_operands = 0 : i64, tpu.core_type = #tpu.core_type<tc>, window_params = [{transform_indices = @transform_0, window_bounds = array<i64: 1, 4, 256>}, {pipeline_mode = #tpu.pipeline_mode<synchronous>, transform_indices = @transform_1, window_bounds = array<i64: 2, 4>}, {pipeline_mode = #tpu.pipeline_mode<synchronous>, transform_indices = @transform_2, window_bounds = array<i64: 2, 1>}, {transform_indices = @transform_3, window_bounds = array<i64: 1, 2, 256>}]} {
    %c0 = arith.constant 0 : index
    %c0_0 = arith.constant 0 : index
    %c0_1 = arith.constant 0 : index
    %0 = vector.load %arg2[%c0, %c0_0, %c0_1] : memref<1x4x256xf32, #tpu.memory_space<vmem>>, vector<1x4x256xf32>
    %1 = vector.shape_cast %0 : vector<1x4x256xf32> to vector<4x256xf32>
    %c0_2 = arith.constant 0 : index
    %c0_3 = arith.constant 0 : index
    %2 = vector.load %arg3[%c0_2, %c0_3] : memref<2x4xf32, #tpu.memory_space<vmem>>, vector<2x4xf32>
    %c0_4 = arith.constant 0 : index
    %c0_5 = arith.constant 0 : index
    %3 = vector.load %arg4[%c0_4, %c0_5] : memref<2x1xf32, #tpu.memory_space<vmem>>, vector<2x1xf32>
    %4 = vector.extract_strided_slice %2 {offsets = [0, 0], sizes = [2, 1], strides = [1, 1]} : vector<2x4xf32> to vector<2x1xf32>
    %5 = vector.extract_strided_slice %1 {offsets = [0, 0], sizes = [1, 256], strides = [1, 1]} : vector<4x256xf32> to vector<1x256xf32>
    %6 = vector.broadcast %4 : vector<2x1xf32> to vector<2x256xf32>
    %7 = vector.broadcast %5 : vector<1x256xf32> to vector<2x256xf32>
    %8 = arith.mulf %6, %7 : vector<2x256xf32>
    %9 = vector.extract_strided_slice %2 {offsets = [0, 1], sizes = [2, 1], strides = [1, 1]} : vector<2x4xf32> to vector<2x1xf32>
    %10 = vector.extract_strided_slice %1 {offsets = [1, 0], sizes = [1, 256], strides = [1, 1]} : vector<4x256xf32> to vector<1x256xf32>
    %11 = vector.broadcast %9 : vector<2x1xf32> to vector<2x256xf32>
    %12 = vector.broadcast %10 : vector<1x256xf32> to vector<2x256xf32>
    %13 = arith.mulf %11, %12 : vector<2x256xf32>
    %14 = arith.addf %8, %13 : vector<2x256xf32>
    %15 = vector.extract_strided_slice %2 {offsets = [0, 2], sizes = [2, 1], strides = [1, 1]} : vector<2x4xf32> to vector<2x1xf32>
    %16 = vector.extract_strided_slice %1 {offsets = [2, 0], sizes = [1, 256], strides = [1, 1]} : vector<4x256xf32> to vector<1x256xf32>
    %17 = vector.broadcast %15 : vector<2x1xf32> to vector<2x256xf32>
    %18 = vector.broadcast %16 : vector<1x256xf32> to vector<2x256xf32>
    %19 = arith.mulf %17, %18 : vector<2x256xf32>
    %20 = arith.addf %14, %19 : vector<2x256xf32>
    %21 = vector.extract_strided_slice %2 {offsets = [0, 3], sizes = [2, 1], strides = [1, 1]} : vector<2x4xf32> to vector<2x1xf32>
    %22 = vector.extract_strided_slice %1 {offsets = [3, 0], sizes = [1, 256], strides = [1, 1]} : vector<4x256xf32> to vector<1x256xf32>
    %23 = vector.broadcast %21 : vector<2x1xf32> to vector<2x256xf32>
    %24 = vector.broadcast %22 : vector<1x256xf32> to vector<2x256xf32>
    %25 = arith.mulf %23, %24 : vector<2x256xf32>
    %26 = arith.addf %20, %25 : vector<2x256xf32>
    %27 = vector.broadcast %3 : vector<2x1xf32> to vector<2x256xf32>
    %28 = arith.addf %26, %27 : vector<2x256xf32>
    %c0_6 = arith.constant 0 : index
    %c0_7 = arith.constant 0 : index
    %c0_8 = arith.constant 0 : index
    %29 = vector.load %arg5[%c0_6, %c0_7, %c0_8] : memref<1x2x256xf32, #tpu.memory_space<vmem>>, vector<1x2x256xf32>
    %30 = vector.shape_cast %29 : vector<1x2x256xf32> to vector<2x256xf32>
    %31 = vector.shape_cast %28 : vector<2x256xf32> to vector<1x2x256xf32>
    tpu.vector_store %arg5[%c0_6, %c0_7, %c0_8], %31 {strides = array<i32>} : memref<1x2x256xf32, #tpu.memory_space<vmem>>, vector<1x2x256xf32>,
    return
  }
  func.func @transform_0(%arg0: i32, %arg1: i32) -> (i32, i32, i32) {
    %c0_i32 = arith.constant 0 : i32
    %c0_i32_0 = arith.constant 0 : i32
    return %arg0, %c0_i32, %arg1 : i32, i32, i32
  }
  func.func @transform_1(%arg0: i32, %arg1: i32) -> (i32, i32) {
    %c0_i32 = arith.constant 0 : i32
    %c0_i32_0 = arith.constant 0 : i32
    %c0_i32_1 = arith.constant 0 : i32
    return %c0_i32, %c0_i32_0 : i32, i32
  }
  func.func @transform_2(%arg0: i32, %arg1: i32) -> (i32, i32) {
    %c0_i32 = arith.constant 0 : i32
    %c0_i32_0 = arith.constant 0 : i32
    %c0_i32_1 = arith.constant 0 : i32
    return %c0_i32, %c0_i32_0 : i32, i32
  }
  func.func @transform_3(%arg0: i32, %arg1: i32) -> (i32, i32, i32) {
    %c0_i32 = arith.constant 0 : i32
    %c0_i32_0 = arith.constant 0 : i32
    return %arg0, %c0_i32, %arg1 : i32, i32, i32
  }
}

</mosaic_0001>

<llo_original>
// kernel: outconv_forward.1
$region0: #{outconv_forward.1}
  #allocation0 [shape = 'u32[]', space=smem, size = 0x4, offset = 0x4, fixed_abs, tag = 'smem constant byte address 0x4 - core index']
  #allocation1 [shape = 'u32[72,128]{1,0:T(1,128)}', space=vmem, size = 0x9000, scoped, tag = 'internal scratch']
  %s0 = inlined_call_operand.vmem [shape: f32[2,4,256], index: 0, kind: input, shape index: {}]
  %s1 = inlined_call_operand.vmem [shape: f32[2,4], index: 1, kind: input, shape index: {}]
  %s2 = inlined_call_operand.vmem [shape: f32[2,1], index: 2, kind: input, shape index: {}]
  %s3 = inlined_call_operand.vmem [shape: f32[2,2,256], index: 3, kind: output, shape index: {}]
  %s4 = sld [smem:[#allocation0]]
  $region45: #{outconv_forward.1} parent=0
    _
  %s6 = ssub.s32 1, %s4
  %s7 = scalar_select 0, %s6, %s4
  loop: start=0, step=1, limit=4
  $region2: #{outconv_forward.1} parent=0 // loop_pre_header
    _
  $region3: #{outconv_forward.1} parent=0 // loop_header
    %s9 = sphi 0, %s13
    %p10 = scmp.ge.s32.totalorder %s9, 4
    %s16 = sphi 0, %s28
    %s17 = sphi 0, %s24
    %s18 = sphi 0, %s16
    %s19 = sphi 0, %s17
    %s20 = sphi 0, %s18
    %s21 = sphi 0, %s19
    %s33 = sphi 0, %s35
    %s36 = sphi 0, %s33
    %s37 = sphi 0, %s36
    %s53 = sphi 0, %s37
    %s57 = sphi 0, %s57
    %s59 = sphi 0, %s57
    %s60 = sphi 0, %s59
    %s74 = sphi 0, %s60
    %s78 = sphi 0, %s78
    %s80 = sphi 0, %s78
    %s81 = sphi 0, %s80
    %s95 = sphi 0, %s81
    %s103 = sphi 0, %s105
    %s106 = sphi 0, %s103
    %s107 = sphi 0, %s106
    %s123 = sphi 0, %s107
  $region4: #{outconv_forward.1} parent=0 // loop_header_branch
    %12 = sbr.rel (%p10) target = $region8
  $region5: #{outconv_forward.1} parent=0 // loop_body
    %s14 = ssub.s32 %s9, 1
    %s15 = ssub.s32 %s9, 2
    %s22 = sadd.s32 1, %s17
    %p23 = scmp.ge.s32.totalorder %s22, 1
    %s24 = scalar_select %p23, 0, %s22
    %s25 = sadd.s32 1, %s16
    %s26 = scalar_select %p23, %s25, %s16
    %p27 = scmp.ge.s32.totalorder %s26, 2
    %s28 = scalar_select %p27, 0, %s26
    %s29 = ssub.s32 %s16, %s28
    %s30 = ssub.s32 %s17, %s24
    %s31 = sor.u32 %s29, %s30
    %p32 = scmp.eq.s32.totalorder %s31, 0
    %s34 = sadd.s32 %s33, 1
    %s35 = scalar_select %p32, %s33, %s34
    %p38 = pneg %p32
    %p39 = scmp.eq.s32.totalorder %s9, 1
    %p40 = por %p38, %p39
    %p41 = scmp.ne.s32.totalorder %s33, %s36
    %p42 = scmp.eq.s32.totalorder %s9, 0
    %p43 = por %p41, %p42
    %p44 = scmp.ne.s32.totalorder %s33, %s36
    %p45 = scmp.eq.s32.totalorder %s14, 1
    %p46 = por %p44, %p45
    %p47 = scmp.ne.s32.totalorder %s36, %s37
    %p48 = scmp.eq.s32.totalorder %s14, 0
    %p49 = por %p47, %p48
    %p50 = scmp.ne.s32.totalorder %s36, %s37
    %p51 = scmp.eq.s32.totalorder %s15, 1
    %p52 = por %p50, %p51
    %p54 = scmp.ne.s32.totalorder %s37, %s53
    %p55 = scmp.eq.s32.totalorder %s15, 0
    %p56 = por %p54, %p55
    %s58 = sadd.s32 %s57, 1
    %p61 = scmp.eq.s32.totalorder %s9, 1
    %p62 = scmp.ne.s32.totalorder %s57, %s59
    %p63 = scmp.eq.s32.totalorder %s9, 0
    %p64 = por %p62, %p63
    %p65 = scmp.ne.s32.totalorder %s57, %s59
    %p66 = scmp.eq.s32.totalorder %s14, 1
    %p67 = por %p65, %p66
    %p68 = scmp.ne.s32.totalorder %s59, %s60
    %p69 = scmp.eq.s32.totalorder %s14, 0
    %p70 = por %p68, %p69
    %p71 = scmp.ne.s32.totalorder %s59, %s60
    %p72 = scmp.eq.s32.totalorder %s15, 1
    %p73 = por %p71, %p72
    %p75 = scmp.ne.s32.totalorder %s60, %s74
    %p76 = scmp.eq.s32.totalorder %s15, 0
    %p77 = por %p75, %p76
    %s79 = sadd.s32 %s78, 1
    %p82 = scmp.eq.s32.totalorder %s9, 1
    %p83 = scmp.ne.s32.totalorder %s78, %s80
    %p84 = scmp.eq.s32.totalorder %s9, 0
    %p85 = por %p83, %p84
    %p86 = scmp.ne.s32.totalorder %s78, %s80
    %p87 = scmp.eq.s32.totalorder %s14, 1
    %p88 = por %p86, %p87
    %p89 = scmp.ne.s32.totalorder %s80, %s81
    %p90 = scmp.eq.s32.totalorder %s14, 0
    %p91 = por %p89, %p90
    %p92 = scmp.ne.s32.totalorder %s80, %s81
    %p93 = scmp.eq.s32.totalorder %s15, 1
    %p94 = por %p92, %p93
    %p96 = scmp.ne.s32.totalorder %s81, %s95
    %p97 = scmp.eq.s32.totalorder %s15, 0
    %p98 = por %p96, %p97
    %s99 = ssub.s32 %s16, %s28
    %s100 = ssub.s32 %s17, %s24
    %s101 = sor.u32 %s99, %s100
    %p102 = scmp.eq.s32.totalorder %s101, 0
    %s104 = sadd.s32 %s103, 1
    %s105 = scalar_select %p102, %s103, %s104
    %p108 = pneg %p102
    %p109 = scmp.eq.s32.totalorder %s9, 1
    %p110 = por %p108, %p109
    %p111 = scmp.ne.s32.totalorder %s103, %s106
    %p112 = scmp.eq.s32.totalorder %s9, 0
    %p113 = por %p111, %p112
    %p114 = scmp.ne.s32.totalorder %s103, %s106
    %p115 = scmp.eq.s32.totalorder %s14, 1
    %p116 = por %p114, %p115
    %p117 = scmp.ne.s32.totalorder %s106, %s107
    %p118 = scmp.eq.s32.totalorder %s14, 0
    %p119 = por %p117, %p118
    %p120 = scmp.ne.s32.totalorder %s106, %s107
    %p121 = scmp.eq.s32.totalorder %s15, 1
    %p122 = por %p120, %p121
    %p124 = scmp.ne.s32.totalorder %s107, %s123
    %p125 = scmp.eq.s32.totalorder %s15, 0
    %p126 = por %p124, %p125
    %p127 = scmp.le.s32.totalorder 1, %s9
    %p128 = scmp.lt.s32.totalorder %s9, 3
    %p129 = pnand %p127, %p128
    %p130 = pneg %p129
    // Predicated region
    $region9: #{outconv_forward.1} parent=5 // pred_check
      _
    $region10: #{outconv_forward.1} parent=5 // pred_check_branch
      %132 = sbr.rel (%p129) target = $region12
    $region11: #{outconv_forward.1} parent=5 // pred_region
      %s133 = ssub.s32 %s9, 1
      // Predicated region
      $region13: #{outconv_forward.1} parent=11 // pred_check
        %p134 = pneg %p70
      $region14: #{outconv_forward.1} parent=11 // pred_check_branch
        %136 = sbr.rel (%p134) target = $region16
      $region15: #{outconv_forward.1} parent=11 // pred_region
        _
      $region16: #{outconv_forward.1} parent=11 // pred_fallthru
        _
      // Predicated region
      $region17: #{outconv_forward.1} parent=11 // pred_check
        %p137 = pneg %p91
      $region18: #{outconv_forward.1} parent=11 // pred_check_branch
        %139 = sbr.rel (%p137) target = $region20
      $region19: #{outconv_forward.1} parent=11 // pred_region
        _
      $region20: #{outconv_forward.1} parent=11 // pred_fallthru
        _
    $region12: #{outconv_forward.1} parent=5 // pred_fallthru
      _
    %p140 = scmp.lt.s32.totalorder %s9, 2
    // Predicated region
    $region21: #{outconv_forward.1} parent=5 // pred_check
      %p141 = pneg %p140
    $region22: #{outconv_forward.1} parent=5 // pred_check_branch
      %143 = sbr.rel (%p141) target = $region24
    $region23: #{outconv_forward.1} parent=5 // pred_region
      // Predicated region
      $region25: #{outconv_forward.1} parent=23 // pred_check
        %p144 = pneg %p43
      $region26: #{outconv_forward.1} parent=23 // pred_check_branch
        %146 = sbr.rel (%p144) target = $region28
      $region27: #{outconv_forward.1} parent=23 // pred_region
        %s147 = smul.u32 2, %s17
        %p148 = scmp.lt.s32.totalorder %s16, 1
        %s149 = scalar_select %p148, %s16, 1
        %p150 = scmp.lt.s32.totalorder %s147, 1
        %s151 = scalar_select %p150, %s147, 1
        %s152 = smul.addr %s149, 2
        %s153 = sadd.s32 %s151, %s152
        %s154 = smul.addr %s153, 4
        %s155 = scalar_lea.vmem %s0, %s154
        %s156 = smul.u32 2, %s17
      $region28: #{outconv_forward.1} parent=23 // pred_fallthru
        _
    $region24: #{outconv_forward.1} parent=5 // pred_fallthru
      _
    %p157 = scmp.le.s32.totalorder 1, %s9
    %p158 = scmp.lt.s32.totalorder %s9, 3
    %p159 = pnand %p157, %p158
    %p160 = pneg %p159
    // Predicated region
    $region29: #{outconv_forward.1} parent=5 // pred_check
      _
    $region30: #{outconv_forward.1} parent=5 // pred_check_branch
      %162 = sbr.rel (%p159) target = $region32
    $region31: #{outconv_forward.1} parent=5 // pred_region
      %s163 = ssub.s32 %s9, 1
      %s164 = smul.u32 2, %s19
      %p165 = scmp.lt.s32.totalorder %s18, 1
      %s166 = scalar_select %p165, %s18, 1
      %p167 = scmp.lt.s32.totalorder %s164, 1
      %s168 = scalar_select %p167, %s164, 1
      %s169 = smul.addr %s166, 2
      %s170 = sadd.s32 %s168, %s169
      %s171 = smul.addr %s170, 4
      %s172 = scalar_lea.vmem %s0, %s171
      %p173 = pneg %p49
      %p174 = pneg %p46
      %p175 = pneg %p70
      %p176 = pneg %p67
      %p177 = pneg %p91
      %p178 = pneg %p88
      %p179 = pneg %p119
      %p180 = pneg %p116
      %s181 = smul.u32 2, %s19
      %p182 = scmp.lt.s32.totalorder %s18, 1
      %s183 = scalar_select %p182, %s18, 1
      %p184 = scmp.lt.s32.totalorder %s181, 1
      %s185 = scalar_select %p184, %s181, 1
      %s186 = smul.addr %s183, 2
      %s187 = sadd.s32 %s185, %s186
      %s188 = smul.addr %s187, 2
      %s189 = scalar_lea.vmem %s3, %s188
      %s190 = smul.u32 2, %s19
      %p191 = scmp.lt.s32.totalorder %s18, 1
      %s192 = scalar_select %p191, %s18, 1
      %p193 = scmp.lt.s32.totalorder %s190, 1
      %s194 = scalar_select %p193, %s190, 1
      %s195 = smul.addr %s192, 2
      %s196 = sadd.s32 %s194, %s195
      %s197 = smul.addr %s196, 4
      %s198 = scalar_lea.vmem %s0, %s197
      %s199 = smul.u32 2, %s19
      %s200 = smul.u32 2, %s19
      %p201 = scmp.lt.s32.totalorder %s18, 1
      %s202 = scalar_select %p201, %s18, 1
      %p203 = scmp.lt.s32.totalorder %s200, 1
      %s204 = scalar_select %p203, %s200, 1
      %s205 = smul.addr %s202, 2
      %s206 = sadd.s32 %s204, %s205
      %s207 = smul.addr %s206, 2
      %s208 = scalar_lea.vmem %s3, %s207
      %s209 = smul.u32 2, %s19
      %v210 = vld [vmem:[%s198] sm:$0xff]
      %v211 = vld [vmem:[%s1] sm:$0x3]
      %v212 = vld [vmem:[%s2] sm:$0x3]
      %214 = vset.pattern.permute.xlu0 0
      %215 = vperm.xlu0 %214, %v211
      %v216 = vpop.permute.xlu0 %215
      %v219 = vperm.slane %v210, 0
      %v220 = vperm.slane %v210, 4
      %v223 = vperm.slane %v219, 0
      %v224 = vperm.slane %v220, 0
      %v225 = vmul.f32 %v216, %v223
      %v226 = vmul.f32 %v216, %v224
      %227 = vset.pattern.permute.xlu0 1
      %228 = vperm.xlu0 %227, %v211
      %v229 = vpop.permute.xlu0 %228
      %v231 = vperm.slane %v210, 1
      %v232 = vperm.slane %v210, 5
      %v235 = vperm.slane %v231, 1
      %v236 = vperm.slane %v232, 1
      %v237 = vmul.f32 %v229, %v235
      %v238 = vmul.f32 %v229, %v236
      %v239 = vadd.f32 %v225, %v237
      %v240 = vadd.f32 %v226, %v238
      %241 = vset.pattern.permute.xlu0 2
      %242 = vperm.xlu0 %241, %v211
      %v243 = vpop.permute.xlu0 %242
      %v245 = vperm.slane %v210, 2
      %v246 = vperm.slane %v210, 6
      %v249 = vperm.slane %v245, 2
      %v250 = vperm.slane %v246, 2
      %v251 = vmul.f32 %v243, %v249
      %v252 = vmul.f32 %v243, %v250
      %v253 = vadd.f32 %v239, %v251
      %v254 = vadd.f32 %v240, %v252
      %255 = vset.pattern.permute.xlu0 3
      %256 = vperm.xlu0 %255, %v211
      %v257 = vpop.permute.xlu0 %256
      %v259 = vperm.slane %v210, 3
      %v260 = vperm.slane %v210, 7
      %v263 = vperm.slane %v259, 3
      %v264 = vperm.slane %v260, 3
      %v265 = vmul.f32 %v257, %v263
      %v266 = vmul.f32 %v257, %v264
      %v267 = vadd.f32 %v253, %v265
      %v268 = vadd.f32 %v254, %v266
      %270 = vset.pattern.permute.xlu0 0
      %271 = vperm.xlu0 %270, %v212
      %v272 = vpop.permute.xlu0 %271
      %v274 = vadd.f32 %v267, %v272
      %v275 = vadd.f32 %v268, %v272
      %v278 = vrot.slane %v275, 6
      %vm279 = vcmask 1041408
      %v280 = vsel %vm279, %v274, %v278
      %282 = vst [vmem:[%s208] sm:$0xf] %v280
      %s283 = smul.u32 2, %s19
      %p284 = scmp.lt.s32.totalorder %s18, 1
      %s285 = scalar_select %p284, %s18, 1
      %p286 = scmp.lt.s32.totalorder %s283, 1
      %s287 = scalar_select %p286, %s283, 1
      %s288 = smul.addr %s285, 2
      %s289 = sadd.s32 %s287, %s288
      %s290 = smul.addr %s289, 2
      %s291 = scalar_lea.vmem %s3, %s290
      // Predicated region
      $region33: #{outconv_forward.1} parent=31 // pred_check
        %p292 = pneg %p116
      $region34: #{outconv_forward.1} parent=31 // pred_check_branch
        %294 = sbr.rel (%p292) target = $region36
      $region35: #{outconv_forward.1} parent=31 // pred_region
        %s295 = smul.u32 2, %s19
      $region36: #{outconv_forward.1} parent=31 // pred_fallthru
        _
    $region32: #{outconv_forward.1} parent=5 // pred_fallthru
      _
    %p296 = scmp.le.s32.totalorder 2, %s9
    // Predicated region
    $region37: #{outconv_forward.1} parent=5 // pred_check
      %p297 = pneg %p296
    $region38: #{outconv_forward.1} parent=5 // pred_check_branch
      %299 = sbr.rel (%p297) target = $region40
    $region39: #{outconv_forward.1} parent=5 // pred_region
      %s300 = ssub.s32 %s9, 2
      // Predicated region
      $region41: #{outconv_forward.1} parent=39 // pred_check
        %p301 = pneg %p122
      $region42: #{outconv_forward.1} parent=39 // pred_check_branch
        %303 = sbr.rel (%p301) target = $region44
      $region43: #{outconv_forward.1} parent=39 // pred_region
        %s304 = smul.u32 2, %s21
        %p305 = scmp.lt.s32.totalorder %s20, 1
        %s306 = scalar_select %p305, %s20, 1
        %p307 = scmp.lt.s32.totalorder %s304, 1
        %s308 = scalar_select %p307, %s304, 1
        %s309 = smul.addr %s306, 2
        %s310 = sadd.s32 %s308, %s309
        %s311 = smul.addr %s310, 2
        %s312 = scalar_lea.vmem %s3, %s311
      $region44: #{outconv_forward.1} parent=39 // pred_fallthru
        _
    $region40: #{outconv_forward.1} parent=5 // pred_fallthru
      _
  $region6: #{outconv_forward.1} parent=0 // loop_footer
    %s13 = sadd.s32 1, %s9
  $region7: #{outconv_forward.1} parent=0 // loop_footer_branch
    %8 = sbr.rel target = $region3
  $region8: #{outconv_forward.1} parent=0 // loop_exit
    _

</llo_original>
